<compile_context>
chip_gen: v5e
topology: v5e:2x2
jax: 0.10.0
libtpu: 0.0.40
codegen_flags: <defaults>
</compile_context>

<pallas_src>
import functools

import jax
import jax.numpy as jnp
from jax.experimental import pallas as pl
from jax.experimental.pallas import tpu as pltpu

EPS = 1e-5


# ---------------------------------------------------------------------------
# Kernels
# ---------------------------------------------------------------------------
def _bn1d_fused_kernel(x_ref, gamma_ref, beta_ref, o_ref, *, inv_n):
    """Single-pass BN for one (N, TILE_C) channel tile: batch stats + normalize."""
    x = x_ref[...].astype(jnp.float32)
    s = jnp.sum(x, axis=0, keepdims=True)            # (1, TILE_C)
    ss = jnp.sum(x * x, axis=0, keepdims=True)       # (1, TILE_C)
    mean = s * inv_n
    var = jnp.maximum(ss * inv_n - mean * mean, 0.0)  # biased var, clamp cancellation
    inv_std = jax.lax.rsqrt(var + EPS)
    scale = inv_std * gamma_ref[...]                 # fold gamma into scale
    shift = beta_ref[...] - mean * scale
    o_ref[...] = (x * scale + shift).astype(o_ref.dtype)


def _bn1d_stats_kernel(x_ref, gamma_ref, beta_ref, scale_ref, shift_ref,
                       sum_ref, sumsq_ref, *, inv_n):
    """Large-N phase 1: accumulate per-channel sum/sumsq over the N ("arbitrary",
    last) grid axis; finalize folded scale/shift on the last step."""
    i = pl.program_id(1)

    @pl.when(i == 0)
    def _():
        sum_ref[...] = jnp.zeros_like(sum_ref)
        sumsq_ref[...] = jnp.zeros_like(sumsq_ref)

    x = x_ref[...].astype(jnp.float32)
    sum_ref[...] += jnp.sum(x, axis=0, keepdims=True)
    sumsq_ref[...] += jnp.sum(x * x, axis=0, keepdims=True)

    @pl.when(i == pl.num_programs(1) - 1)
    def _():
        mean = sum_ref[...] * inv_n
        var = jnp.maximum(sumsq_ref[...] * inv_n - mean * mean, 0.0)
        inv_std = jax.lax.rsqrt(var + EPS)
        scale = inv_std * gamma_ref[...]
        scale_ref[...] = scale
        shift_ref[...] = beta_ref[...] - mean * scale


def _bn1d_normalize_kernel(x_ref, scale_ref, shift_ref, o_ref):
    """Large-N phase 2: y = x * scale + shift (per-channel affine)."""
    x = x_ref[...].astype(jnp.float32)
    o_ref[...] = (x * scale_ref[...] + shift_ref[...]).astype(o_ref.dtype)


# ---------------------------------------------------------------------------
# Tiling / budget helpers
# ---------------------------------------------------------------------------
def _round_up(v, m):
    return ((v + m - 1) // m) * m


def _vmem_limit_bytes():
    """Generation-aware scoped-VMEM limit: ~half of physical VMEM per core
    (v5e/v6e: 128 MiB -> 64 MiB limit, v7x: 64 MiB -> 32 MiB limit)."""
    cap = None
    try:
        info = pltpu.get_tpu_info()
        cap = getattr(info, "vmem_capacity_bytes", None)
    except Exception:
        cap = None
    if not cap:
        cap = 64 * 1024 * 1024  # conservative default (v7x has the smallest VMEM)
    return int(cap) // 2


def _choose_tile_c_single(n, c128, in_bytes, out_bytes, budget_bytes):
    """Largest lane-dense (multiple-of-128) channel tile whose full-batch block
    fits the budget, counting double-buffered IO *and* the f32 temporaries.
    Returns 0 if even a 128-wide column block does not fit (-> two-phase path)."""
    per_col = 2 * n * (in_bytes + out_bytes) + 2 * n * 4 + 16
    cols = budget_bytes // per_col
    if cols < 128:
        return 0
    tile = min((cols // 128) * 128, c128)
    # Keep >= 4 (or at least 2) grid steps when C allows: spreads the "parallel"
    # channel axis across both TensorCores on v7x and keeps the pipeline busy.
    for steps in (4, 2):
        cap = (c128 // steps) // 128 * 128
        if cap >= 128:
            tile = min(tile, cap)
            break
    return int(tile)


def _pad2d(a, rows, cols):
    r, c = a.shape
    if r == rows and c == cols:
        return a
    return jnp.pad(a, ((0, rows - r), (0, cols - c)))


def _param2d(p, cols, fill):
    p = p.astype(jnp.float32).reshape(1, -1)
    c = p.shape[1]
    if c == cols:
        return p
    return jnp.pad(p, ((0, 0), (0, cols - c)), constant_values=fill)


# ---------------------------------------------------------------------------
# Wrapper
# ---------------------------------------------------------------------------
def bn_linear_forward(x, gamma, beta, *, tile_c=None, tile_n=None,
                      force_two_phase=False):
    """BatchNorm1d forward with training-mode batch statistics.

    x: (N, C); gamma, beta: (C,).  Returns (N, C) in x.dtype.
    """
    n, c = x.shape
    in_bytes = jnp.dtype(x.dtype).itemsize
    out_bytes = in_bytes
    vmem_limit = _vmem_limit_bytes()
    budget = int(vmem_limit * 0.85)        # headroom under the scoped limit
    c128 = _round_up(c, 128)

    if tile_c is not None:
        assert tile_c % 128 == 0, "tile_c must be a multiple of 128 (lane-dense)"
    if tile_n is not None:
        assert tile_n % 8 == 0, "tile_n must be a multiple of 8 (sublane-dense)"

    use_two_phase = force_two_phase
    tc = tile_c
    if not use_two_phase:
        if tc is None:
            tc = _choose_tile_c_single(n, c128, in_bytes, out_bytes, budget)
        if tc is None or tc < 128:
            use_two_phase = True           # full-batch block won't fit VMEM
            tc = tile_c

    # ------------------------------------------------------------------ #
    # Single-pass path: full batch resident per channel tile.
    # ------------------------------------------------------------------ #
    if not use_two_phase:
        tc = min(tc, c128)
        c_pad = _round_up(c, tc)
        x_p = _pad2d(x, n, c_pad)
        g_p = _param2d(gamma, c_pad, 1.0)
        b_p = _param2d(beta, c_pad, 0.0)

        cost = pl.CostEstimate(
            flops=int(7 * n * c_pad),
            transcendentals=int(c_pad),
            bytes_accessed=int(n * c_pad * (in_bytes + out_bytes) + 2 * c_pad * 4),
        )
        out = pl.pallas_call(
            functools.partial(_bn1d_fused_kernel, inv_n=1.0 / n),
            out_shape=jax.ShapeDtypeStruct((n, c_pad), x.dtype),
            grid=(c_pad // tc,),
            in_specs=[
                pl.BlockSpec((n, tc), lambda j: (0, j)),
                pl.BlockSpec((1, tc), lambda j: (0, j)),
                pl.BlockSpec((1, tc), lambda j: (0, j)),
            ],
            out_specs=pl.BlockSpec((n, tc), lambda j: (0, j)),
            compiler_params=pltpu.CompilerParams(
                dimension_semantics=("parallel",),
                vmem_limit_bytes=vmem_limit,
            ),
            cost_estimate=cost,
        )(x_p, g_p, b_p)
        return out[:, :c]

    # ------------------------------------------------------------------ #
    # Two-phase path (large N): stats sweep then normalize sweep.
    # ------------------------------------------------------------------ #
    if tc is None:
        tc = min(512, c128)
    per_row = 2 * tc * (in_bytes + out_bytes) + 2 * tc * 4
    if tile_n is None:
        tn = min(max((budget // per_row) // 8 * 8, 8), 1024)
    else:
        tn = tile_n

    c_pad = _round_up(c, tc)
    n_pad = _round_up(n, tn)
    # Zero padding rows contribute nothing to sum/sumsq; divide by the true n.
    x_p = _pad2d(x, n_pad, c_pad)
    g_p = _param2d(gamma, c_pad, 1.0)
    b_p = _param2d(beta, c_pad, 0.0)

    grid = (c_pad // tc, n_pad // tn)

    stats_cost = pl.CostEstimate(
        flops=int(4 * n_pad * c_pad),
        transcendentals=int(c_pad),
        bytes_accessed=int(n_pad * c_pad * in_bytes + 4 * c_pad * 4),
    )
    scale, shift = pl.pallas_call(
        functools.partial(_bn1d_stats_kernel, inv_n=1.0 / n),
        out_shape=(jax.ShapeDtypeStruct((1, c_pad), jnp.float32),
                   jax.ShapeDtypeStruct((1, c_pad), jnp.float32)),
        grid=grid,
        in_specs=[
            pl.BlockSpec((tn, tc), lambda j, i: (i, j)),
            pl.BlockSpec((1, tc), lambda j, i: (0, j)),
            pl.BlockSpec((1, tc), lambda j, i: (0, j)),
        ],
        out_specs=(
            pl.BlockSpec((1, tc), lambda j, i: (0, j)),
            pl.BlockSpec((1, tc), lambda j, i: (0, j)),
        ),
        scratch_shapes=[
            pltpu.VMEM((1, tc), jnp.float32),
            pltpu.VMEM((1, tc), jnp.float32),
        ],
        compiler_params=pltpu.CompilerParams(
            dimension_semantics=("parallel", "arbitrary"),
            vmem_limit_bytes=vmem_limit,
        ),
        cost_estimate=stats_cost,
    )(x_p, g_p, b_p)

    norm_cost = pl.CostEstimate(
        flops=int(2 * n_pad * c_pad),
        transcendentals=0,
        bytes_accessed=int(n_pad * c_pad * (in_bytes + out_bytes) + 2 * c_pad * 4),
    )
    out = pl.pallas_call(
        _bn1d_normalize_kernel,
        out_shape=jax.ShapeDtypeStruct((n_pad, c_pad), x.dtype),
        grid=grid,
        in_specs=[
            pl.BlockSpec((tn, tc), lambda j, i: (i, j)),
            pl.BlockSpec((1, tc), lambda j, i: (0, j)),
            pl.BlockSpec((1, tc), lambda j, i: (0, j)),
        ],
        out_specs=pl.BlockSpec((tn, tc), lambda j, i: (i, j)),
        compiler_params=pltpu.CompilerParams(
            dimension_semantics=("parallel", "parallel"),
            vmem_limit_bytes=vmem_limit,
        ),
        cost_estimate=norm_cost,
    )(x_p, scale, shift)
    return out[:n, :c]


# ---------------------------------------------------------------------------
# Pure-JAX reference
# ---------------------------------------------------------------------------
def bn_linear_reference(x, gamma, beta):
    xf = x.astype(jnp.float32)
    mean = jnp.mean(xf, axis=0, keepdims=True)
    var = jnp.mean((xf - mean) ** 2, axis=0, keepdims=True)
    y = (xf - mean) / jnp.sqrt(var + EPS) * gamma.reshape(1, -1).astype(jnp.float32) \
        + beta.reshape(1, -1).astype(jnp.float32)
    return y.astype(x.dtype)


if __name__ == "__main__":
    key = jax.random.PRNGKey(0)
    k1, k2, k3, k4, k5, k6 = jax.random.split(key, 6)

    # Case 1: the module's toy shape (batch=8, in_dim=32).  Channels are padded
    # to 128 (lane-dense stores); single-pass full-batch block, grid=(1,).
    N, C = 8, 32
    x = jax.random.normal(k1, (N, C), dtype=jnp.float32)
    gamma = jnp.ones((C,), jnp.float32)    # nn.BatchNorm1d default init
    beta = jnp.zeros((C,), jnp.float32)
    out = jax.block_until_ready(bn_linear_forward(x, gamma, beta))
    ref = bn_linear_reference(x, gamma, beta)
    assert out.shape == (N, C)
    assert jnp.allclose(out, ref, atol=1e-4, rtol=1e-4), "mismatch vs reference (case 1)"

    # Case 2: lane-aligned channels with a forced 128-wide tile -> 2-step
    # streaming grid, non-trivial gamma/beta to exercise the folded affine.
    N2, C2 = 16, 256
    x2 = jax.random.normal(k2, (N2, C2), dtype=jnp.float32)
    gamma2 = 1.0 + 0.1 * jax.random.normal(k3, (C2,), dtype=jnp.float32)
    beta2 = 0.1 * jax.random.normal(k4, (C2,), dtype=jnp.float32)
    out2 = jax.block_until_ready(bn_linear_forward(x2, gamma2, beta2, tile_c=128))
    ref2 = bn_linear_reference(x2, gamma2, beta2)
    assert jnp.allclose(out2, ref2, atol=1e-4, rtol=1e-4), "mismatch vs reference (case 2)"

    # Case 3: force the large-N two-phase path on a small shape; N and C are
    # deliberately not tile-aligned to cover the padding logic (N 40->48, C 320->384).
    N3, C3 = 40, 320
    x3 = 2.0 * jax.random.normal(k5, (N3, C3), dtype=jnp.float32) + 0.5
    gamma3 = jnp.ones((C3,), jnp.float32)
    beta3 = jnp.zeros((C3,), jnp.float32)
    out3 = jax.block_until_ready(
        bn_linear_forward(x3, gamma3, beta3, force_two_phase=True, tile_c=128, tile_n=16))
    ref3 = bn_linear_reference(x3, gamma3, beta3)
    assert out3.shape == (N3, C3)
    assert jnp.allclose(out3, ref3, atol=1e-4, rtol=1e-4), "mismatch vs reference (case 3)"

    # Case 4: bf16 input (statistics still accumulated in f32 inside the kernel).
    N4, C4 = 32, 128
    x4 = jax.random.normal(k6, (N4, C4), dtype=jnp.bfloat16)
    gamma4 = jnp.ones((C4,), jnp.float32)
    beta4 = jnp.zeros((C4,), jnp.float32)
    out4 = jax.block_until_ready(bn_linear_forward(x4, gamma4, beta4))
    ref4 = bn_linear_reference(x4, gamma4, beta4)
    assert jnp.allclose(out4.astype(jnp.float32), ref4.astype(jnp.float32),
                        atol=3e-2, rtol=3e-2), "mismatch vs reference (case 4)"

    print("KERNEL_OK")
</pallas_src>

<mosaic_0001>
module attributes {stable_mosaic.version = 11 : i64} {
  func.func @_bn1d_fused_kernel(%arg0: i32, %arg1: memref<8x128xf32, #tpu.memory_space<vmem>>, %arg2: memref<1x128xf32, #tpu.memory_space<vmem>>, %arg3: memref<1x128xf32, #tpu.memory_space<vmem>>, %arg4: memref<8x128xf32, #tpu.memory_space<vmem>>) attributes {dimension_semantics = [#tpu.dimension_semantics<parallel>], iteration_bounds = array<i64: 1>, scalar_prefetch = 0 : i64, scratch_operands = 0 : i64, tpu.core_type = #tpu.core_type<tc>, window_params = [{transform_indices = @transform_0, window_bounds = array<i64: 8, 128>}, {transform_indices = @transform_1, window_bounds = array<i64: 1, 128>}, {transform_indices = @transform_2, window_bounds = array<i64: 1, 128>}, {transform_indices = @transform_3, window_bounds = array<i64: 8, 128>}]} {
    %c0 = arith.constant 0 : index
    %c0_0 = arith.constant 0 : index
    %0 = vector.load %arg1[%c0, %c0_0] : memref<8x128xf32, #tpu.memory_space<vmem>>, vector<8x128xf32>
    %cst = arith.constant dense<0.000000e+00> : vector<128xf32>
    %1 = vector.multi_reduction <add>, %0, %cst [0] : vector<8x128xf32> to vector<128xf32>
    %2 = vector.shape_cast %1 : vector<128xf32> to vector<1x128xf32>
    %3 = arith.mulf %0, %0 : vector<8x128xf32>
    %cst_1 = arith.constant dense<0.000000e+00> : vector<128xf32>
    %4 = vector.multi_reduction <add>, %3, %cst_1 [0] : vector<8x128xf32> to vector<128xf32>
    %5 = vector.shape_cast %4 : vector<128xf32> to vector<1x128xf32>
    %cst_2 = arith.constant 1.250000e-01 : f32
    %6 = vector.broadcast %cst_2 : f32 to vector<1x128xf32>
    %7 = arith.mulf %2, %6 : vector<1x128xf32>
    %cst_3 = arith.constant 1.250000e-01 : f32
    %8 = vector.broadcast %cst_3 : f32 to vector<1x128xf32>
    %9 = arith.mulf %5, %8 : vector<1x128xf32>
    %10 = arith.mulf %7, %7 : vector<1x128xf32>
    %11 = arith.subf %9, %10 : vector<1x128xf32>
    %cst_4 = arith.constant 0.000000e+00 : f32
    %12 = vector.broadcast %cst_4 : f32 to vector<1x128xf32>
    %13 = arith.maximumf %11, %12 : vector<1x128xf32>
    %cst_5 = arith.constant 9.99999974E-6 : f32
    %14 = vector.broadcast %cst_5 : f32 to vector<1x128xf32>
    %15 = arith.addf %13, %14 : vector<1x128xf32>
    %16 = math.rsqrt %15 : vector<1x128xf32>
    %c0_6 = arith.constant 0 : index
    %c0_7 = arith.constant 0 : index
    %17 = vector.load %arg2[%c0_6, %c0_7] : memref<1x128xf32, #tpu.memory_space<vmem>>, vector<1x128xf32>
    %18 = arith.mulf %16, %17 : vector<1x128xf32>
    %c0_8 = arith.constant 0 : index
    %c0_9 = arith.constant 0 : index
    %19 = vector.load %arg3[%c0_8, %c0_9] : memref<1x128xf32, #tpu.memory_space<vmem>>, vector<1x128xf32>
    %20 = arith.mulf %7, %18 : vector<1x128xf32>
    %21 = arith.subf %19, %20 : vector<1x128xf32>
    %22 = vector.broadcast %18 : vector<1x128xf32> to vector<8x128xf32>
    %23 = arith.mulf %0, %22 : vector<8x128xf32>
    %24 = vector.broadcast %21 : vector<1x128xf32> to vector<8x128xf32>
    %25 = arith.addf %23, %24 : vector<8x128xf32>
    %c0_10 = arith.constant 0 : index
    %c0_11 = arith.constant 0 : index
    %26 = vector.load %arg4[%c0_10, %c0_11] : memref<8x128xf32, #tpu.memory_space<vmem>>, vector<8x128xf32>
    tpu.vector_store %arg4[%c0_10, %c0_11], %25 {strides = array<i32>} : memref<8x128xf32, #tpu.memory_space<vmem>>, vector<8x128xf32>,
    return
  }
  func.func @transform_0(%arg0: i32) -> (i32, i32) {
    %c0_i32 = arith.constant 0 : i32
    %c0_i32_0 = arith.constant 0 : i32
    return %c0_i32, %arg0 : i32, i32
  }
  func.func @transform_1(%arg0: i32) -> (i32, i32) {
    %c0_i32 = arith.constant 0 : i32
    %c0_i32_0 = arith.constant 0 : i32
    return %c0_i32, %arg0 : i32, i32
  }
  func.func @transform_2(%arg0: i32) -> (i32, i32) {
    %c0_i32 = arith.constant 0 : i32
    %c0_i32_0 = arith.constant 0 : i32
    return %c0_i32, %arg0 : i32, i32
  }
  func.func @transform_3(%arg0: i32) -> (i32, i32) {
    %c0_i32 = arith.constant 0 : i32
    %c0_i32_0 = arith.constant 0 : i32
    return %c0_i32, %arg0 : i32, i32
  }
}

</mosaic_0001>

<llo_original>
// kernel: tpu_custom_call.1
$region0: #{tpu_custom_call.1}
  #allocation0 [shape = 'u32[]', space=smem, size = 0x4, offset = 0x4, fixed_abs, tag = 'smem constant byte address 0x4 - core index']
  #allocation1 [shape = 'u32[72,128]{1,0:T(1,128)}', space=vmem, size = 0x9000, scoped, tag = 'internal scratch']
  %s0 = inlined_call_operand.hbm [shape: f32[8,128], index: 0, kind: input, shape index: {}]
  %s1 = inlined_call_operand.hbm [shape: f32[1,128], index: 1, kind: input, shape index: {}]
  %s2 = inlined_call_operand.vmem [shape: f32[1,128], index: 2, kind: input, shape index: {}]
  %s3 = inlined_call_operand.hbm [shape: f32[8,128], index: 3, kind: output, shape index: {}]
  %s4 = sld [smem:[#allocation0]]
  $region30: #{tpu_custom_call.1} parent=0
    _
  %s6 = ssub.s32 1, %s4
  %s7 = scalar_select 0, %s6, %s4
  $region1: #{tpu_custom_call.1} parent=0
    #allocation2 [shape = 'u8[4096]{0}', space=vmem, size = 0x1000, scoped, tag = 'input window, operand 0, single buffered']
    #allocation3 [shape = 's32[1]{0}', space=sflag, size = 0x4, scoped, tag = 'scoped memory for tpu_custom_call.1']
    #allocation4 [shape = 's32[1]{0}', space=sflag, size = 0x4, scoped, tag = 'scoped memory for tpu_custom_call.1']
    #allocation5 [shape = 'u8[512]{0}', space=vmem, size = 0x400, scoped, tag = 'input window, operand 1, single buffered']
    #allocation6 [shape = 's32[1]{0}', space=sflag, size = 0x4, scoped, tag = 'scoped memory for tpu_custom_call.1']
    #allocation7 [shape = 'u8[4096]{0}', space=vmem, size = 0x1000, scoped, tag = 'output window, operand 0, single buffered']
    %8 = vsyncpa [#allocation3], 0
    %9 = vsyncpa [#allocation6], 0
    %10 = vsyncpa [#allocation4], 0
    // Predicated region
    $region2: #{tpu_custom_call.1} parent=1 // pred_check
      _
    $region3: #{tpu_custom_call.1} parent=1 // pred_check_branch
      %12 = sbr.rel (0) target = $region5
    $region4: #{tpu_custom_call.1} parent=1 // pred_region
      %14 = vsyncadd [#allocation3], 0
      %s16 = sshll.u32 %s0, 4
      %s17 = int_to_ptr.hbm [resolvable:$true] %s16
      %s18 = sshll.u32 [#allocation2], 4
      %s19 = int_to_ptr.vmem [resolvable:$true] %s18
      %21 = dma.hbm_to_vmem [thread:$0]  %s17, 128, %s19, [#allocation3]
    $region5: #{tpu_custom_call.1} parent=1 // pred_fallthru
      _
    // Predicated region
    $region6: #{tpu_custom_call.1} parent=1 // pred_check
      _
    $region7: #{tpu_custom_call.1} parent=1 // pred_check_branch
      %23 = sbr.rel (0) target = $region9
    $region8: #{tpu_custom_call.1} parent=1 // pred_region
      %25 = vsyncadd [#allocation6], 0
      %s27 = sshll.u32 %s1, 4
      %s28 = int_to_ptr.hbm [resolvable:$true] %s27
      %s29 = sshll.u32 [#allocation5], 4
      %s30 = int_to_ptr.vmem [resolvable:$true] %s29
      %32 = dma.hbm_to_vmem [thread:$0]  %s28, 16, %s30, [#allocation6]
    $region9: #{tpu_custom_call.1} parent=1 // pred_fallthru
      _
    // Predicated region
    $region10: #{tpu_custom_call.1} parent=1 // pred_check
      _
    $region11: #{tpu_custom_call.1} parent=1 // pred_check_branch
      %34 = sbr.rel (0) target = $region13
    $region12: #{tpu_custom_call.1} parent=1 // pred_region
      _
    $region13: #{tpu_custom_call.1} parent=1 // pred_fallthru
      _
    // Predicated region
    $region14: #{tpu_custom_call.1} parent=1 // pred_check
      _
    $region15: #{tpu_custom_call.1} parent=1 // pred_check_branch
      %36 = sbr.rel (0) target = $region17
    $region16: #{tpu_custom_call.1} parent=1 // pred_region
      %38 = dma.done [#allocation3], 128
    $region17: #{tpu_custom_call.1} parent=1 // pred_fallthru
      _
    // Predicated region
    $region18: #{tpu_custom_call.1} parent=1 // pred_check
      _
    $region19: #{tpu_custom_call.1} parent=1 // pred_check_branch
      %40 = sbr.rel (0) target = $region21
    $region20: #{tpu_custom_call.1} parent=1 // pred_region
      %42 = dma.done [#allocation6], 16
    $region21: #{tpu_custom_call.1} parent=1 // pred_fallthru
      _
    %v43 = vld [vmem:[#allocation2] sm:$0xff]
    %v44 = vrot.slane %v43, 4
    %v45 = vadd.f32 %v43, %v44
    %v46 = vrot.slane %v45, 2
    %v47 = vadd.f32 %v45, %v46
    %v48 = vrot.slane %v47, 1
    %v49 = vadd.f32 %v47, %v48
    %v50 = vmul.f32 %v43, %v43
    %v51 = vrot.slane %v50, 4
    %v52 = vadd.f32 %v50, %v51
    %v53 = vrot.slane %v52, 2
    %v54 = vadd.f32 %v52, %v53
    %v55 = vrot.slane %v54, 1
    %v56 = vadd.f32 %v54, %v55
    %v57 = vmul.f32 %v49, 0.125
    %v58 = vmul.f32 %v56, 0.125
    %v59 = vmul.f32 %v57, %v57
    %v60 = vsub.f32 %v58, %v59
    %v61 = vmax.f32 %v60, 0.0
    %v62 = vadd.f32 %v61, 1e-05
    %v63 = vrsqrt.pop %v62
    %v64 = vmul.f32 %v63, %v62
    %v65 = vmul.f32 %v64, %v63
    %v66 = vmul.f32 0.5, %v65
    %v67 = vsub.f32 1.5, %v66
    %v68 = vmul.f32 %v63, %v67
    %vm69 = vweird.f32 %v62
    %vm70 = vweird.f32 %v63
    %vm71 = vmor %vm69, %vm70
    %v72 = vsel %vm71, %v63, %v68
    %v73 = vld [vmem:[#allocation5] sm:$0x1]
    %v74 = vmul.f32 %v72, %v73
    %v75 = vld [vmem:[%s2] sm:$0x1]
    %v76 = vmul.f32 %v57, %v74
    %v77 = vsub.f32 %v75, %v76
    %v78 = vperm.slane %v74, 0
    %v79 = vmul.f32 %v43, %v78
    %v81 = vperm.slane %v77, 0
    %v83 = vadd.f32 %v79, %v81
    %84 = vst [vmem:[#allocation7] sm:$0xff] %v83
    // Predicated region
    $region22: #{tpu_custom_call.1} parent=1 // pred_check
      _
    $region23: #{tpu_custom_call.1} parent=1 // pred_check_branch
      %86 = sbr.rel (0) target = $region25
    $region24: #{tpu_custom_call.1} parent=1 // pred_region
      %88 = vsyncadd [#allocation4], 0
      %s90 = sshll.u32 [#allocation7], 4
      %s91 = int_to_ptr.vmem [resolvable:$true] %s90
      %s92 = sshll.u32 %s3, 4
      %s93 = int_to_ptr.hbm [resolvable:$true] %s92
      %95 = dma.vmem_to_hbm [thread:$0]  %s91, 128, %s93, [#allocation4]
    $region25: #{tpu_custom_call.1} parent=1 // pred_fallthru
      _
    // Predicated region
    $region26: #{tpu_custom_call.1} parent=1 // pred_check
      _
    $region27: #{tpu_custom_call.1} parent=1 // pred_check_branch
      %97 = sbr.rel (0) target = $region29
    $region28: #{tpu_custom_call.1} parent=1 // pred_region
      %99 = dma.done [#allocation4], 128
    $region29: #{tpu_custom_call.1} parent=1 // pred_fallthru
      _
    %100 = vsyncpa [#allocation3], 1
    %101 = vsyncpa [#allocation6], 1
    %102 = vsyncpa [#allocation4], 1

</llo_original>
